<compile_context>
chip_gen: v7x
topology: tpu7x:2x2x1
jax: 0.10.0
libtpu: 0.0.40
codegen_flags: <defaults>
</compile_context>

<pallas_src>
import functools

import jax
import jax.numpy as jnp
from jax.experimental import pallas as pl
from jax.experimental.pallas import tpu as pltpu


_MASK_VALUE = -1e30  # large-negative instead of -inf to avoid inf-inf NaNs


# ----------------------------------------------------------------------------
# Small helpers
# ----------------------------------------------------------------------------
def _compiler_params(dim_sem, vmem_limit_bytes=None):
    kwargs = dict(dimension_semantics=dim_sem)
    if vmem_limit_bytes is not None:
        kwargs["vmem_limit_bytes"] = vmem_limit_bytes
    return pltpu.CompilerParams(**kwargs)


def _sublane(dtype):
    # f32 -> 8 rows / vreg, bf16 -> 16, int8/fp8 -> 32
    return max(8, 8 * (4 // jnp.dtype(dtype).itemsize))


def _pick_row_block(rows, target, dtype=jnp.float32):
    """Second-to-last (sublane) tile: full if small, else a big sublane multiple."""
    if rows <= target:
        return rows
    s = _sublane(dtype)
    return max(s, (target // s) * s)


def _pick_lane_block(dim, target):
    """Last (lane) tile: full dim unless it is a large multiple of 128."""
    if dim <= target or dim % 128 != 0:
        return dim
    return max(128, (target // 128) * 128)


def _pick_reduce_block(dim, target):
    """K tile must evenly divide K (OOB reads would corrupt the accumulator)."""
    if dim <= target:
        return dim
    t = (target // 128) * 128
    while t >= 128 and dim % t != 0:
        t -= 128
    return t if (t >= 128 and dim % t == 0) else dim


# ----------------------------------------------------------------------------
# RMSNorm kernels
# ----------------------------------------------------------------------------
def _rmsnorm_kernel(x_ref, w_ref, o_ref, *, eps):
    x_in = x_ref[...]
    x32 = x_in.astype(jnp.float32)
    var = jnp.mean(x32 * x32, axis=-1, keepdims=True)
    x_hat = x32 * jax.lax.rsqrt(var + eps)
    o_ref[...] = (w_ref[...] * x_hat.astype(x_in.dtype)).astype(o_ref.dtype)


def rmsnorm(x2d, weight, eps, *, out_dtype=None, block_rows_target=512,
            vmem_limit_bytes=None):
    rows, hidden = x2d.shape
    out_dtype = x2d.dtype if out_dtype is None else out_dtype
    bm = _pick_row_block(rows, block_rows_target, x2d.dtype)
    grid = (pl.cdiv(rows, bm),)
    return pl.pallas_call(
        functools.partial(_rmsnorm_kernel, eps=eps),
        out_shape=jax.ShapeDtypeStruct((rows, hidden), out_dtype),
        grid_spec=pltpu.PrefetchScalarGridSpec(
            num_scalar_prefetch=0,
            grid=grid,
            in_specs=[
                pl.BlockSpec((bm, hidden), lambda i: (i, 0)),
                pl.BlockSpec((1, hidden), lambda i: (0, 0)),  # resident weight
            ],
            out_specs=pl.BlockSpec((bm, hidden), lambda i: (i, 0)),
        ),
        compiler_params=_compiler_params(("parallel",), vmem_limit_bytes),
    )(x2d, weight.reshape(1, hidden))


def _add_rmsnorm_kernel(x_ref, r_ref, w_ref, sum_ref, o_ref, *, eps):
    # residual add in the activation dtype (matches PyTorch), then f32 norm
    s_in = x_ref[...] + r_ref[...]
    sum_ref[...] = s_in.astype(sum_ref.dtype)
    x32 = s_in.astype(jnp.float32)
    var = jnp.mean(x32 * x32, axis=-1, keepdims=True)
    x_hat = x32 * jax.lax.rsqrt(var + eps)
    o_ref[...] = (w_ref[...] * x_hat.astype(s_in.dtype)).astype(o_ref.dtype)


def add_rmsnorm(x2d, res2d, weight, eps, *, out_dtype=None,
                block_rows_target=512, vmem_limit_bytes=None):
    """Returns (x + res, rmsnorm(x + res)) fused in one pass over HBM."""
    rows, hidden = x2d.shape
    out_dtype = x2d.dtype if out_dtype is None else out_dtype
    bm = _pick_row_block(rows, block_rows_target, x2d.dtype)
    grid = (pl.cdiv(rows, bm),)
    return pl.pallas_call(
        functools.partial(_add_rmsnorm_kernel, eps=eps),
        out_shape=(jax.ShapeDtypeStruct((rows, hidden), x2d.dtype),
                   jax.ShapeDtypeStruct((rows, hidden), out_dtype)),
        grid_spec=pltpu.PrefetchScalarGridSpec(
            num_scalar_prefetch=0,
            grid=grid,
            in_specs=[
                pl.BlockSpec((bm, hidden), lambda i: (i, 0)),
                pl.BlockSpec((bm, hidden), lambda i: (i, 0)),
                pl.BlockSpec((1, hidden), lambda i: (0, 0)),  # resident weight
            ],
            out_specs=(pl.BlockSpec((bm, hidden), lambda i: (i, 0)),
                       pl.BlockSpec((bm, hidden), lambda i: (i, 0))),
        ),
        compiler_params=_compiler_params(("parallel",), vmem_limit_bytes),
    )(x2d, res2d, weight.reshape(1, hidden))


# ----------------------------------------------------------------------------
# Linear (matmul + optional bias + optional fused residual add)
# ----------------------------------------------------------------------------
def _linear_kernel(*refs, has_bias, has_residual):
    i = 0
    x_ref = refs[i]; i += 1
    w_ref = refs[i]; i += 1
    b_ref = None
    r_ref = None
    if has_bias:
        b_ref = refs[i]; i += 1
    if has_residual:
        r_ref = refs[i]; i += 1
    o_ref = refs[i]; i += 1
    acc_ref = refs[i]

    k = pl.program_id(2)

    @pl.when(k == 0)
    def _():
        acc_ref[...] = jnp.zeros_like(acc_ref)

    acc_ref[...] += jnp.dot(x_ref[...], w_ref[...],
                            preferred_element_type=jnp.float32)

    @pl.when(k == pl.num_programs(2) - 1)
    def _():
        out = acc_ref[...]
        if has_bias:
            out = out + b_ref[...].astype(jnp.float32)
        if has_residual:
            out = out + r_ref[...].astype(jnp.float32)
        o_ref[...] = out.astype(o_ref.dtype)


def linear(x2d, w, b=None, residual=None, *, out_dtype=None,
           block_m_target=512, block_n_target=512, block_k_target=1024,
           vmem_limit_bytes=None):
    rows, K = x2d.shape
    K2, N = w.shape
    assert K == K2, (K, K2)
    out_dtype = x2d.dtype if out_dtype is None else out_dtype

    bm = _pick_row_block(rows, block_m_target, x2d.dtype)
    bn = _pick_lane_block(N, block_n_target)
    bk = _pick_reduce_block(K, block_k_target)
    grid = (pl.cdiv(rows, bm), pl.cdiv(N, bn), K // bk)

    in_specs = [
        pl.BlockSpec((bm, bk), lambda i, j, k: (i, k)),
        pl.BlockSpec((bk, bn), lambda i, j, k: (k, j)),
    ]
    operands = [x2d, w]
    if b is not None:
        in_specs.append(pl.BlockSpec((1, bn), lambda i, j, k: (0, j)))
        operands.append(b.reshape(1, N))
    if residual is not None:
        in_specs.append(pl.BlockSpec((bm, bn), lambda i, j, k: (i, j)))
        operands.append(residual)

    kernel = functools.partial(_linear_kernel,
                               has_bias=b is not None,
                               has_residual=residual is not None)
    return pl.pallas_call(
        kernel,
        out_shape=jax.ShapeDtypeStruct((rows, N), out_dtype),
        grid_spec=pltpu.PrefetchScalarGridSpec(
            num_scalar_prefetch=0,
            grid=grid,
            in_specs=in_specs,
            out_specs=pl.BlockSpec((bm, bn), lambda i, j, k: (i, j)),
            scratch_shapes=[pltpu.VMEM((bm, bn), jnp.float32)],
        ),
        compiler_params=_compiler_params(("parallel", "parallel", "arbitrary"),
                                         vmem_limit_bytes),
    )(*operands)


# ----------------------------------------------------------------------------
# Rotary position embedding
# ----------------------------------------------------------------------------
def _rope_kernel(x_ref, cos_ref, sin_ref, o_ref, *, half):
    x = x_ref[...].astype(jnp.float32)
    cos = cos_ref[...].astype(jnp.float32)
    sin = sin_ref[...].astype(jnp.float32)
    x1 = x[:, :half]
    x2 = x[:, half:]
    rot = jnp.concatenate([-x2, x1], axis=-1)        # rotate_half(x)
    o_ref[...] = (x * cos + rot * sin).astype(o_ref.dtype)


def apply_rope(x, cos, sin, *, block_s_target=512, vmem_limit_bytes=None):
    """x: (num_sequences, S, D); cos/sin: (S, D)."""
    nseq, S, D = x.shape
    bs = _pick_row_block(S, block_s_target, x.dtype)
    grid = (nseq, pl.cdiv(S, bs))
    return pl.pallas_call(
        functools.partial(_rope_kernel, half=D // 2),
        out_shape=jax.ShapeDtypeStruct((nseq, S, D), x.dtype),
        grid_spec=pltpu.PrefetchScalarGridSpec(
            num_scalar_prefetch=0,
            grid=grid,
            in_specs=[
                pl.BlockSpec((None, bs, D), lambda i, j: (i, j, 0)),
                pl.BlockSpec((bs, D), lambda i, j: (j, 0)),
                pl.BlockSpec((bs, D), lambda i, j: (j, 0)),
            ],
            out_specs=pl.BlockSpec((None, bs, D), lambda i, j: (i, j, 0)),
        ),
        compiler_params=_compiler_params(("parallel", "parallel"),
                                         vmem_limit_bytes),
    )(x, cos, sin)


# ----------------------------------------------------------------------------
# Causal flash attention with GQA (K/V head chosen via index_map)
# ----------------------------------------------------------------------------
def _flash_attn_kernel(q_ref, k_ref, v_ref, o_ref, m_sc, l_sc, acc_sc, *,
                       scale, causal, kv_len, block_q, block_kv):
    ki = pl.program_id(3)

    @pl.when(ki == 0)
    def _():
        m_sc[...] = jnp.full_like(m_sc, _MASK_VALUE)
        l_sc[...] = jnp.zeros_like(l_sc)
        acc_sc[...] = jnp.zeros_like(acc_sc)

    q = q_ref[...].astype(jnp.float32) * scale
    k = k_ref[...].astype(jnp.float32)
    s = jax.lax.dot_general(q, k, (((1,), (1,)), ((), ())),
                            preferred_element_type=jnp.float32)  # (bq, bkv)

    q_pos = pl.program_id(2) * block_q + jax.lax.broadcasted_iota(
        jnp.int32, (block_q, block_kv), 0)
    k_pos = ki * block_kv + jax.lax.broadcasted_iota(
        jnp.int32, (block_q, block_kv), 1)
    mask = k_pos < kv_len
    if causal:
        mask = jnp.logical_and(mask, q_pos >= k_pos)
    s = jnp.where(mask, s, _MASK_VALUE)

    m_prev = m_sc[...]
    m_new = jnp.maximum(m_prev, jnp.max(s, axis=-1, keepdims=True))
    alpha = jnp.exp(m_prev - m_new)
    p = jnp.exp(s - m_new)
    l_sc[...] = alpha * l_sc[...] + jnp.sum(p, axis=-1, keepdims=True)
    acc_sc[...] = alpha * acc_sc[...] + jnp.dot(
        p.astype(v_ref.dtype), v_ref[...], preferred_element_type=jnp.float32)
    m_sc[...] = m_new

    @pl.when(ki == pl.num_programs(3) - 1)
    def _():
        o_ref[...] = (acc_sc[...] / l_sc[...]).astype(o_ref.dtype)


def flash_attention(q, k, v, *, scale, causal=True,
                    block_q_target=256, block_kv_target=256,
                    vmem_limit_bytes=None):
    B, H, S, D = q.shape
    _, KVH, Skv, _ = k.shape
    G = H // KVH
    bq = _pick_row_block(S, block_q_target, q.dtype)
    bkv = _pick_row_block(Skv, block_kv_target, k.dtype)
    grid = (B, H, pl.cdiv(S, bq), pl.cdiv(Skv, bkv))

    kernel = functools.partial(_flash_attn_kernel, scale=scale, causal=causal,
                               kv_len=Skv, block_q=bq, block_kv=bkv)
    return pl.pallas_call(
        kernel,
        out_shape=jax.ShapeDtypeStruct((B, H, S, D), q.dtype),
        grid_spec=pltpu.PrefetchScalarGridSpec(
            num_scalar_prefetch=0,
            grid=grid,
            in_specs=[
                pl.BlockSpec((None, None, bq, D),
                             lambda b, h, qi, ki: (b, h, qi, 0)),
                pl.BlockSpec((None, None, bkv, D),
                             lambda b, h, qi, ki: (b, h // G, ki, 0)),
                pl.BlockSpec((None, None, bkv, D),
                             lambda b, h, qi, ki: (b, h // G, ki, 0)),
            ],
            out_specs=pl.BlockSpec((None, None, bq, D),
                                   lambda b, h, qi, ki: (b, h, qi, 0)),
            scratch_shapes=[
                pltpu.VMEM((bq, 1), jnp.float32),   # running max
                pltpu.VMEM((bq, 1), jnp.float32),   # running denominator
                pltpu.VMEM((bq, D), jnp.float32),   # output accumulator
            ],
        ),
        compiler_params=_compiler_params(
            ("parallel", "parallel", "parallel", "arbitrary"),
            vmem_limit_bytes),
    )(q, k, v)


# ----------------------------------------------------------------------------
# SwiGLU elementwise: silu(gate) * up
# ----------------------------------------------------------------------------
def _silu_mul_kernel(g_ref, u_ref, o_ref):
    g = g_ref[...].astype(jnp.float32)
    u = u_ref[...].astype(jnp.float32)
    sig = 1.0 / (1.0 + jnp.exp(-g))
    o_ref[...] = (g * sig * u).astype(o_ref.dtype)


def silu_mul(g, u, *, block_rows_target=512, vmem_limit_bytes=None):
    rows, n = g.shape
    bm = _pick_row_block(rows, block_rows_target, g.dtype)
    grid = (pl.cdiv(rows, bm),)
    return pl.pallas_call(
        _silu_mul_kernel,
        out_shape=jax.ShapeDtypeStruct((rows, n), g.dtype),
        grid_spec=pltpu.PrefetchScalarGridSpec(
            num_scalar_prefetch=0,
            grid=grid,
            in_specs=[pl.BlockSpec((bm, n), lambda i: (i, 0)),
                      pl.BlockSpec((bm, n), lambda i: (i, 0))],
            out_specs=pl.BlockSpec((bm, n), lambda i: (i, 0)),
        ),
        compiler_params=_compiler_params(("parallel",), vmem_limit_bytes),
    )(g, u)


# ----------------------------------------------------------------------------
# Full decoder layer (Pallas composition)
# ----------------------------------------------------------------------------
def qwen2_decoder_layer(x, params, cos, sin, *, eps, num_heads, num_kv_heads,
                        head_dim):
    B, S, E = x.shape
    rows = B * S
    x2d = x.reshape(rows, E)
    scaling = head_dim ** -0.5

    # ---- self-attention block ----
    h = rmsnorm(x2d, params["ln1_w"], eps)

    q = linear(h, params["wq"], params["bq"])
    k = linear(h, params["wk"], params["bk"])
    v = linear(h, params["wv"], params["bv"])

    q = q.reshape(B, S, num_heads, head_dim).transpose(0, 2, 1, 3)
    k = k.reshape(B, S, num_kv_heads, head_dim).transpose(0, 2, 1, 3)
    v = v.reshape(B, S, num_kv_heads, head_dim).transpose(0, 2, 1, 3)

    q = apply_rope(q.reshape(B * num_heads, S, head_dim), cos, sin)
    q = q.reshape(B, num_heads, S, head_dim)
    k = apply_rope(k.reshape(B * num_kv_heads, S, head_dim), cos, sin)
    k = k.reshape(B, num_kv_heads, S, head_dim)

    attn = flash_attention(q, k, v, scale=scaling, causal=True)
    attn2d = attn.transpose(0, 2, 1, 3).reshape(rows, num_heads * head_dim)

    o = linear(attn2d, params["wo"])

    # ---- residual add + post-attention norm (fused) ----
    res2, h2 = add_rmsnorm(o, x2d, params["ln2_w"], eps)

    # ---- MLP (SwiGLU) ----
    g = linear(h2, params["wg"])
    u = linear(h2, params["wu"])
    a = silu_mul(g, u)
    out2d = linear(a, params["wd"], residual=res2)   # fused final residual add

    return out2d.reshape(B, S, E)


# ----------------------------------------------------------------------------
# Pure-JAX reference mirroring the PyTorch forward
# ----------------------------------------------------------------------------
def qwen2_decoder_layer_ref(x, params, cos, sin, *, eps, num_heads,
                            num_kv_heads, head_dim):
    hp = jax.lax.Precision.HIGHEST

    def rms(h, w):
        dt = h.dtype
        h32 = h.astype(jnp.float32)
        var = jnp.mean(h32 * h32, axis=-1, keepdims=True)
        return w * (h32 * jax.lax.rsqrt(var + eps)).astype(dt)

    def rot_half(t):
        half = t.shape[-1] // 2
        return jnp.concatenate([-t[..., half:], t[..., :half]], axis=-1)

    B, S, E = x.shape
    scaling = head_dim ** -0.5

    residual = x
    h = rms(x, params["ln1_w"])
    q = jnp.einsum("bse,ed->bsd", h, params["wq"], precision=hp) + params["bq"]
    k = jnp.einsum("bse,ed->bsd", h, params["wk"], precision=hp) + params["bk"]
    v = jnp.einsum("bse,ed->bsd", h, params["wv"], precision=hp) + params["bv"]
    q = q.reshape(B, S, num_heads, head_dim).transpose(0, 2, 1, 3)
    k = k.reshape(B, S, num_kv_heads, head_dim).transpose(0, 2, 1, 3)
    v = v.reshape(B, S, num_kv_heads, head_dim).transpose(0, 2, 1, 3)

    cos_b, sin_b = cos[None, None], sin[None, None]
    q = q * cos_b + rot_half(q) * sin_b
    k = k * cos_b + rot_half(k) * sin_b

    G = num_heads // num_kv_heads
    k = jnp.repeat(k, G, axis=1)
    v = jnp.repeat(v, G, axis=1)

    s = jnp.einsum("bhqd,bhkd->bhqk", q, k, precision=hp) * scaling
    causal = jnp.tril(jnp.ones((S, S), dtype=bool))
    s = jnp.where(causal[None, None], s, -jnp.inf)
    p = jax.nn.softmax(s, axis=-1)
    attn = jnp.einsum("bhqk,bhkd->bhqd", p, v, precision=hp)
    attn = attn.transpose(0, 2, 1, 3).reshape(B, S, num_heads * head_dim)
    o = jnp.einsum("bsd,de->bse", attn, params["wo"], precision=hp)

    h = residual + o
    residual = h
    h2 = rms(h, params["ln2_w"])
    g = jnp.einsum("bse,ei->bsi", h2, params["wg"], precision=hp)
    u = jnp.einsum("bse,ei->bsi", h2, params["wu"], precision=hp)
    a = jax.nn.silu(g) * u
    d = jnp.einsum("bsi,ie->bse", a, params["wd"], precision=hp)
    return d + residual


# ----------------------------------------------------------------------------
# Demo / self-test
# ----------------------------------------------------------------------------
if __name__ == "__main__":
    batch, seq = 2, 8
    hidden = 64
    num_heads, num_kv_heads, head_dim = 4, 2, 16
    intermediate = 128
    eps = 1e-6
    rope_theta = 10000.0

    keys = jax.random.split(jax.random.PRNGKey(0), 13)

    def w(kk, shape, scale=0.08):
        return scale * jax.random.normal(kk, shape, dtype=jnp.float32)

    params = {
        "ln1_w": 1.0 + 0.1 * jax.random.normal(keys[0], (hidden,), jnp.float32),
        "ln2_w": 1.0 + 0.1 * jax.random.normal(keys[1], (hidden,), jnp.float32),
        # weights stored in (in_features, out_features) layout (== W.T of nn.Linear)
        "wq": w(keys[2], (hidden, num_heads * head_dim)),
        "bq": w(keys[3], (num_heads * head_dim,), 0.02),
        "wk": w(keys[4], (hidden, num_kv_heads * head_dim)),
        "bk": w(keys[5], (num_kv_heads * head_dim,), 0.02),
        "wv": w(keys[6], (hidden, num_kv_heads * head_dim)),
        "bv": w(keys[7], (num_kv_heads * head_dim,), 0.02),
        "wo": w(keys[8], (num_heads * head_dim, hidden)),
        "wg": w(keys[9], (hidden, intermediate)),
        "wu": w(keys[10], (hidden, intermediate)),
        "wd": w(keys[11], (intermediate, hidden)),
    }
    x = jax.random.normal(keys[12], (batch, seq, hidden), dtype=jnp.float32)

    # position embeddings (cos, sin) as produced by Qwen2RotaryEmbedding
    pos = jnp.arange(seq, dtype=jnp.float32)
    inv_freq = 1.0 / (rope_theta ** (jnp.arange(0, head_dim, 2,
                                                dtype=jnp.float32) / head_dim))
    freqs = pos[:, None] * inv_freq[None, :]
    emb = jnp.concatenate([freqs, freqs], axis=-1)     # (seq, head_dim)
    cos, sin = jnp.cos(emb), jnp.sin(emb)

    out = qwen2_decoder_layer(x, params, cos, sin, eps=eps,
                              num_heads=num_heads, num_kv_heads=num_kv_heads,
                              head_dim=head_dim)
    out = jax.block_until_ready(out)

    ref = qwen2_decoder_layer_ref(x, params, cos, sin, eps=eps,
                                  num_heads=num_heads,
                                  num_kv_heads=num_kv_heads,
                                  head_dim=head_dim)

    assert out.shape == ref.shape and out.dtype == ref.dtype
    max_diff = float(jnp.max(jnp.abs(out - ref)))
    assert jnp.allclose(out, ref, atol=5e-3, rtol=5e-3), f"max|diff|={max_diff}"

    print("KERNEL_OK")
</pallas_src>

<mosaic_0001>
module attributes {stable_mosaic.version = 11 : i64} {
  func.func @_rmsnorm_kernel(%arg0: i32, %arg1: memref<16x64xf32, #tpu.memory_space<vmem>>, %arg2: memref<1x64xf32, #tpu.memory_space<vmem>>, %arg3: memref<16x64xf32, #tpu.memory_space<vmem>>) attributes {dimension_semantics = [#tpu.dimension_semantics<parallel>], iteration_bounds = array<i64: 1>, scalar_prefetch = 0 : i64, scratch_operands = 0 : i64, tpu.core_type = #tpu.core_type<tc>, window_params = [{transform_indices = @transform_0, window_bounds = array<i64: 16, 64>}, {pipeline_mode = #tpu.pipeline_mode<synchronous>, transform_indices = @transform_1, window_bounds = array<i64: 1, 64>}, {transform_indices = @transform_2, window_bounds = array<i64: 16, 64>}]} {
    %c0 = arith.constant 0 : index
    %c0_0 = arith.constant 0 : index
    %0 = vector.load %arg1[%c0, %c0_0] : memref<16x64xf32, #tpu.memory_space<vmem>>, vector<16x64xf32>
    %1 = arith.mulf %0, %0 : vector<16x64xf32>
    %cst = arith.constant dense<0.000000e+00> : vector<16xf32>
    %2 = vector.multi_reduction <add>, %1, %cst [1] : vector<16x64xf32> to vector<16xf32>
    %3 = vector.shape_cast %2 : vector<16xf32> to vector<16x1xf32>
    %cst_1 = arith.constant 6.400000e+01 : f32
    %4 = vector.broadcast %cst_1 : f32 to vector<16x1xf32>
    %5 = arith.divf %3, %4 : vector<16x1xf32>
    %cst_2 = arith.constant 9.99999997E-7 : f32
    %6 = vector.broadcast %cst_2 : f32 to vector<16x1xf32>
    %7 = arith.addf %5, %6 : vector<16x1xf32>
    %8 = math.rsqrt %7 : vector<16x1xf32>
    %9 = vector.broadcast %8 : vector<16x1xf32> to vector<16x64xf32>
    %10 = arith.mulf %0, %9 : vector<16x64xf32>
    %c0_3 = arith.constant 0 : index
    %c0_4 = arith.constant 0 : index
    %11 = vector.load %arg2[%c0_3, %c0_4] : memref<1x64xf32, #tpu.memory_space<vmem>>, vector<1x64xf32>
    %12 = vector.broadcast %11 : vector<1x64xf32> to vector<16x64xf32>
    %13 = arith.mulf %12, %10 : vector<16x64xf32>
    %c0_5 = arith.constant 0 : index
    %c0_6 = arith.constant 0 : index
    %14 = vector.load %arg3[%c0_5, %c0_6] : memref<16x64xf32, #tpu.memory_space<vmem>>, vector<16x64xf32>
    tpu.vector_store %arg3[%c0_5, %c0_6], %13 {strides = array<i32>} : memref<16x64xf32, #tpu.memory_space<vmem>>, vector<16x64xf32>,
    return
  }
  func.func @transform_0(%arg0: i32) -> (i32, i32) {
    %c0_i32 = arith.constant 0 : i32
    %c0_i32_0 = arith.constant 0 : i32
    return %arg0, %c0_i32 : i32, i32
  }
  func.func @transform_1(%arg0: i32) -> (i32, i32) {
    %c0_i32 = arith.constant 0 : i32
    %c0_i32_0 = arith.constant 0 : i32
    %c0_i32_1 = arith.constant 0 : i32
    return %c0_i32, %c0_i32_0 : i32, i32
  }
  func.func @transform_2(%arg0: i32) -> (i32, i32) {
    %c0_i32 = arith.constant 0 : i32
    %c0_i32_0 = arith.constant 0 : i32
    return %arg0, %c0_i32 : i32, i32
  }
}

</mosaic_0001>

<llo_original>
// kernel: tpu_custom_call.1
$region0: #{tpu_custom_call.1}
  #allocation0 [shape = 'u32[]', space=smem, size = 0x4, offset = 0x4, fixed_abs, tag = 'smem constant byte address 0x4 - core index']
  #allocation1 [shape = 'u32[144,128]{1,0:T(1,128)}', space=vmem, size = 0x12000, scoped, tag = 'internal scratch']
  %s0 = inlined_call_operand.hbm [shape: f32[16,64], index: 0, kind: input, shape index: {}]
  %s1 = inlined_call_operand.vmem [shape: f32[1,64], index: 1, kind: input, shape index: {}]
  %s2 = inlined_call_operand.hbm [shape: f32[16,64], index: 2, kind: output, shape index: {}]
  %s3 = sld [smem:[#allocation0]]
  $region22: #{tpu_custom_call.1} parent=0
    _
  %s5 = ssub.s32 1, %s3
  %s6 = scalar_select 0, %s5, %s3
  $region1: #{tpu_custom_call.1} parent=0
    #allocation2 [shape = 'u8[8192]{0}', space=vmem, size = 0x2000, scoped, tag = 'input window, operand 0, single buffered']
    #allocation3 [shape = 's32[1]{0}', space=sflag, size = 0x4, scoped, tag = 'scoped memory for tpu_custom_call.1']
    #allocation4 [shape = 's32[1]{0}', space=sflag, size = 0x4, scoped, tag = 'scoped memory for tpu_custom_call.1']
    #allocation5 [shape = 'u8[8192]{0}', space=vmem, size = 0x2000, scoped, tag = 'output window, operand 0, single buffered']
    %7 = vsyncpa [#allocation3], 0
    %8 = vsyncpa [#allocation4], 0
    // Predicated region
    $region2: #{tpu_custom_call.1} parent=1 // pred_check
      _
    $region3: #{tpu_custom_call.1} parent=1 // pred_check_branch
      %10 = sbr.rel (0) target = $region5
    $region4: #{tpu_custom_call.1} parent=1 // pred_region
      %s12 = ssub.s32 256, 256
      %13 = vsyncadd [#allocation3], %s12
      %s14 = sshll.u32 [#allocation2], 4
      %s15 = int_to_ptr.vmem [resolvable:$true] %s14
      %20 = dma.hbm_to_vmem [thread:$0]  %s0, 256, %s15, [#allocation3], 128, 128, 8
    $region5: #{tpu_custom_call.1} parent=1 // pred_fallthru
      _
    // Predicated region
    $region6: #{tpu_custom_call.1} parent=1 // pred_check
      _
    $region7: #{tpu_custom_call.1} parent=1 // pred_check_branch
      %22 = sbr.rel (0) target = $region9
    $region8: #{tpu_custom_call.1} parent=1 // pred_region
      _
    $region9: #{tpu_custom_call.1} parent=1 // pred_fallthru
      _
    // Predicated region
    $region10: #{tpu_custom_call.1} parent=1 // pred_check
      _
    $region11: #{tpu_custom_call.1} parent=1 // pred_check_branch
      %24 = sbr.rel (0) target = $region13
    $region12: #{tpu_custom_call.1} parent=1 // pred_region
      %25 = dma.done [#allocation3], 256
    $region13: #{tpu_custom_call.1} parent=1 // pred_fallthru
      _
    %v26 = vld [vmem:[#allocation2] sm:$0xff]
    %v27 = vld [vmem:[#allocation2 + $0x8] sm:$0xff]
    %v28 = vmul.f32 %v26, %v26
    %v29 = vmul.f32 %v27, %v27
    %vm30 = vcmask 523264
    %v31 = vsel %vm30, %v28, 0.0
    %32 = vadd.xlane.f32.xlu0 %v31
    %v33 = vpop.xlane.xlu0 %32
    %v34 = vsel %vm30, %v29, 0.0
    %35 = vadd.xlane.f32.xlu0 %v34
    %v36 = vpop.xlane.xlu0 %35
    %v37 = vrcp.pop 64.0
    %v38 = vmul.f32 %v33, %v37
    %v39 = vmul.f32 %v36, %v37
    %v40 = vadd.f32 %v38, 1e-06
    %v41 = vadd.f32 %v39, 1e-06
    %v42 = vrsqrt.pop %v40
    %v43 = vrsqrt.pop %v41
    %v44 = vmul.f32 %v26, %v42
    %v45 = vmul.f32 %v27, %v43
    %v46 = vld [vmem:[%s1] sm:$0x1]
    %v48 = vlaneseq
    %v49 = vshrl.u32 %v48, 7
    %v50 = vsub.s32 0, %v49
    %v51 = vrot.slane %v46, %v50
    %v53 = vmul.f32 %v51, %v44
    %v54 = vmul.f32 %v51, %v45
    %55 = vst.msk [vmem:[#allocation5] sm:$0xff] %vm30, %v53
    %56 = vst.msk [vmem:[#allocation5 + $0x8] sm:$0xff] %vm30, %v54
    // Predicated region
    $region14: #{tpu_custom_call.1} parent=1 // pred_check
      _
    $region15: #{tpu_custom_call.1} parent=1 // pred_check_branch
      %58 = sbr.rel (0) target = $region17
    $region16: #{tpu_custom_call.1} parent=1 // pred_region
      %s60 = ssub.s32 256, 256
      %61 = vsyncadd [#allocation4], %s60
      %s62 = sshll.u32 [#allocation5], 4
      %s63 = int_to_ptr.vmem [resolvable:$true] %s62
      %68 = dma.vmem_to_hbm [thread:$0]  %s63, 256, %s2, [#allocation4], 128, 128, 8
    $region17: #{tpu_custom_call.1} parent=1 // pred_fallthru
      _
    // Predicated region
    $region18: #{tpu_custom_call.1} parent=1 // pred_check
      _
    $region19: #{tpu_custom_call.1} parent=1 // pred_check_branch
      %70 = sbr.rel (0) target = $region21
    $region20: #{tpu_custom_call.1} parent=1 // pred_region
      %71 = dma.done [#allocation4], 256
    $region21: #{tpu_custom_call.1} parent=1 // pred_fallthru
      _
    %72 = vsyncpa [#allocation3], 1
    %73 = vsyncpa [#allocation4], 1

</llo_original>
